<compile_context>
chip_gen: v7x
topology: tpu7x:2x2x1
jax: 0.10.0
libtpu: 0.0.40
codegen_flags: <defaults>
</compile_context>

<pallas_src>
import functools
import math

import jax
import jax.numpy as jnp
from jax.experimental import pallas as pl
from jax.experimental.pallas import tpu as pltpu

_LANES = 128
_DEFAULT_TILE_ROWS = 4096  # 4096 * 128 * 4B = 2 MiB per f32 buffer


def _round_up(x, m):
    return ((x + m - 1) // m) * m


def _hash_u32(x):
    """lowbias32-style integer finalizer: u32 -> well-mixed u32 (VPU-only ops)."""
    x = x ^ (x >> jnp.uint32(16))
    x = x * jnp.uint32(0x7FEB352D)
    x = x ^ (x >> jnp.uint32(15))
    x = x * jnp.uint32(0x846CA68B)
    x = x ^ (x >> jnp.uint32(16))
    return x


def _counter_normal(seed_u32, base_u32, shape):
    """Counter-based standard-normal noise using only jnp ops.

    Keyed on (seed, global element index), so tiles are decorrelated by
    construction regardless of grid order or which core runs which tile.
    """
    rows, lanes = shape
    row = jax.lax.broadcasted_iota(jnp.uint32, shape, 0)
    lane = jax.lax.broadcasted_iota(jnp.uint32, shape, 1)
    ctr = base_u32 + row * jnp.uint32(lanes) + lane
    b1 = _hash_u32(ctr ^ (seed_u32 * jnp.uint32(0x9E3779B9) + jnp.uint32(0x85EBCA6B)))
    b2 = _hash_u32(ctr ^ (seed_u32 * jnp.uint32(0xC2B2AE35) + jnp.uint32(0x27D4EB2F)))
    # 24-bit uniforms strictly inside (0, 1): avoids log(0).
    u1 = ((b1 >> jnp.uint32(8)).astype(jnp.float32) + 0.5) * jnp.float32(1.0 / 16777216.0)
    u2 = ((b2 >> jnp.uint32(8)).astype(jnp.float32) + 0.5) * jnp.float32(1.0 / 16777216.0)
    # Box-Muller.
    r = jnp.sqrt(-2.0 * jnp.log(u1))
    return r * jnp.cos(jnp.float32(2.0 * math.pi) * u2)


def _gaussian_dropout_kernel(seed_ref, x_ref, o_ref, *, alpha, tile_rows,
                             use_tpu_prng):
    shape = x_ref.shape  # (tile_rows, 128)
    if use_tpu_prng:
        # Per-tile seed offset keeps every tile (and the two v7x TCs under a
        # "parallel" grid axis) statistically decorrelated. One scalar add.
        pltpu.prng_seed(seed_ref[0] + pl.program_id(0))
        z = pltpu.stateful_normal(shape, jnp.float32)
        # Note (v7x): if the normal transform's transcendentals ever saturate
        # the single EUP slot at 3.2 TB/s HBM, swap in a VPU-only
        # sum-of-uniforms approximation from pltpu.prng_random_bits.
    else:
        seed = seed_ref[0].astype(jnp.uint32)
        base = pl.program_id(0).astype(jnp.uint32) * jnp.uint32(tile_rows * _LANES)
        z = _counter_normal(seed, base, shape)

    eps = z * jnp.float32(alpha) + jnp.float32(1.0)
    xv = x_ref[...]
    if xv.dtype == jnp.float32:
        o_ref[...] = xv * eps
    else:
        # bf16 (v6e/v7x): multiply in the input dtype; noise stays f32.
        o_ref[...] = (xv * eps.astype(xv.dtype)).astype(o_ref.dtype)


def gaussian_dropout(x, seed, alpha=1.0, tile_rows=_DEFAULT_TILE_ROWS):
    """out = x * (randn(x.shape) * alpha + 1), any input shape."""
    orig_shape = x.shape
    orig_dtype = x.dtype
    total = x.size

    # Flatten to a lane-dense 2D slab; pick a sublane-aligned tile and pad the
    # row count so the tile divides it exactly (unmasked stores, no tail tile).
    rows = pl.cdiv(total, _LANES)
    tr = min(int(tile_rows), _round_up(rows, 8))
    tr = _round_up(tr, 8)
    padded_rows = _round_up(rows, tr)
    grid_rows = padded_rows // tr

    xf = x.reshape(-1)
    pad = padded_rows * _LANES - total
    if pad:
        xf = jnp.pad(xf, (0, pad))
    x2 = xf.reshape(padded_rows, _LANES)

    seed_arr = jnp.asarray([seed], dtype=jnp.int32)
    use_tpu_prng = jax.default_backend() == "tpu"

    kernel = functools.partial(
        _gaussian_dropout_kernel,
        alpha=float(alpha), tile_rows=tr, use_tpu_prng=use_tpu_prng)

    out2 = pl.pallas_call(
        kernel,
        out_shape=jax.ShapeDtypeStruct((padded_rows, _LANES), orig_dtype),
        grid_spec=pltpu.PrefetchScalarGridSpec(
            num_scalar_prefetch=1,
            grid=(grid_rows,),
            in_specs=[pl.BlockSpec((tr, _LANES), lambda i, s: (i, 0))],
            out_specs=pl.BlockSpec((tr, _LANES), lambda i, s: (i, 0)),
        ),
        compiler_params=pltpu.CompilerParams(
            # "parallel": independent tiles -> shard across v7x's two TCs.
            dimension_semantics=("parallel",),
        ),
    )(seed_arr, x2)

    out = out2.reshape(-1)
    if pad:
        out = out[:total]
    return out.reshape(orig_shape)


if __name__ == "__main__":
    key = jax.random.PRNGKey(0)
    # NCHW input, like the PyTorch module would see from a conv stack.
    x = jax.random.normal(key, (2, 4, 16, 16), dtype=jnp.float32)

    alpha = 1.0  # matches GaussianDropout(alpha=1.0)
    out = gaussian_dropout(x, seed=0, alpha=alpha)
    out = jax.block_until_ready(out)

    # Sanity checks: shape/dtype preserved; output is x scaled by ~N(1, alpha)
    # noise (finite, not identically equal to x).
    assert out.shape == x.shape and out.dtype == x.dtype
    assert bool(jnp.all(jnp.isfinite(out)))
    assert not bool(jnp.allclose(out, x))

    print("KERNEL_OK")
</pallas_src>

<mosaic_0001>
module attributes {stable_mosaic.version = 11 : i64} {
  func.func @_gaussian_dropout_kernel(%arg0: i32, %arg1: memref<1xi32, #tpu.memory_space<smem>>, %arg2: memref<16x128xf32, #tpu.memory_space<vmem>>, %arg3: memref<16x128xf32, #tpu.memory_space<vmem>>) attributes {dimension_semantics = [#tpu.dimension_semantics<parallel>], iteration_bounds = array<i64: 1>, scalar_prefetch = 1 : i64, scratch_operands = 0 : i64, tpu.core_type = #tpu.core_type<tc>, window_params = [{transform_indices = @transform_0, window_bounds = array<i64: 16, 128>}, {transform_indices = @transform_1, window_bounds = array<i64: 16, 128>}]} {
    %c0 = arith.constant 0 : index
    %0 = memref.load %arg1[%c0] : memref<1xi32, #tpu.memory_space<smem>>
    %c2048_i32 = arith.constant 2048 : i32
    %1 = arith.muli %arg0, %c2048_i32 : i32
    %2 = tpu.iota {dimensions = array<i32: 0>} : vector<16x128xi32>
    %3 = tpu.iota {dimensions = array<i32: 1>} : vector<16x128xi32>
    %c128_i32 = arith.constant 128 : i32
    %4 = vector.broadcast %c128_i32 : i32 to vector<16x128xi32>
    %5 = arith.muli %2, %4 : vector<16x128xi32>
    %6 = vector.broadcast %1 : i32 to vector<16x128xi32>
    %7 = arith.addi %6, %5 : vector<16x128xi32>
    %8 = arith.addi %7, %3 : vector<16x128xi32>
    %c-1640531527_i32 = arith.constant -1640531527 : i32
    %9 = arith.muli %0, %c-1640531527_i32 : i32
    %c-2048144789_i32 = arith.constant -2048144789 : i32
    %10 = arith.addi %9, %c-2048144789_i32 : i32
    %11 = vector.broadcast %10 : i32 to vector<16x128xi32>
    %12 = arith.xori %8, %11 : vector<16x128xi32>
    %c16_i32 = arith.constant 16 : i32
    %13 = vector.broadcast %c16_i32 : i32 to vector<16x128xi32>
    %14 = arith.shrui %12, %13 : vector<16x128xi32>
    %15 = arith.xori %12, %14 : vector<16x128xi32>
    %c2146121005_i32 = arith.constant 2146121005 : i32
    %16 = vector.broadcast %c2146121005_i32 : i32 to vector<16x128xi32>
    %17 = arith.muli %15, %16 : vector<16x128xi32>
    %c15_i32 = arith.constant 15 : i32
    %18 = vector.broadcast %c15_i32 : i32 to vector<16x128xi32>
    %19 = arith.shrui %17, %18 : vector<16x128xi32>
    %20 = arith.xori %17, %19 : vector<16x128xi32>
    %c-2073254261_i32 = arith.constant -2073254261 : i32
    %21 = vector.broadcast %c-2073254261_i32 : i32 to vector<16x128xi32>
    %22 = arith.muli %20, %21 : vector<16x128xi32>
    %c16_i32_0 = arith.constant 16 : i32
    %23 = vector.broadcast %c16_i32_0 : i32 to vector<16x128xi32>
    %24 = arith.shrui %22, %23 : vector<16x128xi32>
    %25 = arith.xori %22, %24 : vector<16x128xi32>
    %c-1028477387_i32 = arith.constant -1028477387 : i32
    %26 = arith.muli %0, %c-1028477387_i32 : i32
    %c668265263_i32 = arith.constant 668265263 : i32
    %27 = arith.addi %26, %c668265263_i32 : i32
    %28 = vector.broadcast %27 : i32 to vector<16x128xi32>
    %29 = arith.xori %8, %28 : vector<16x128xi32>
    %c16_i32_1 = arith.constant 16 : i32
    %30 = vector.broadcast %c16_i32_1 : i32 to vector<16x128xi32>
    %31 = arith.shrui %29, %30 : vector<16x128xi32>
    %32 = arith.xori %29, %31 : vector<16x128xi32>
    %c2146121005_i32_2 = arith.constant 2146121005 : i32
    %33 = vector.broadcast %c2146121005_i32_2 : i32 to vector<16x128xi32>
    %34 = arith.muli %32, %33 : vector<16x128xi32>
    %c15_i32_3 = arith.constant 15 : i32
    %35 = vector.broadcast %c15_i32_3 : i32 to vector<16x128xi32>
    %36 = arith.shrui %34, %35 : vector<16x128xi32>
    %37 = arith.xori %34, %36 : vector<16x128xi32>
    %c-2073254261_i32_4 = arith.constant -2073254261 : i32
    %38 = vector.broadcast %c-2073254261_i32_4 : i32 to vector<16x128xi32>
    %39 = arith.muli %37, %38 : vector<16x128xi32>
    %c16_i32_5 = arith.constant 16 : i32
    %40 = vector.broadcast %c16_i32_5 : i32 to vector<16x128xi32>
    %41 = arith.shrui %39, %40 : vector<16x128xi32>
    %42 = arith.xori %39, %41 : vector<16x128xi32>
    %c8_i32 = arith.constant 8 : i32
    %43 = vector.broadcast %c8_i32 : i32 to vector<16x128xi32>
    %44 = arith.shrui %25, %43 : vector<16x128xi32>
    %45 = arith.uitofp %44 : vector<16x128xi32> to vector<16x128xf32>
    %cst = arith.constant 5.000000e-01 : f32
    %46 = vector.broadcast %cst : f32 to vector<16x128xf32>
    %47 = arith.addf %45, %46 : vector<16x128xf32>
    %cst_6 = arith.constant 5.96046448E-8 : f32
    %48 = vector.broadcast %cst_6 : f32 to vector<16x128xf32>
    %49 = arith.mulf %47, %48 : vector<16x128xf32>
    %c8_i32_7 = arith.constant 8 : i32
    %50 = vector.broadcast %c8_i32_7 : i32 to vector<16x128xi32>
    %51 = arith.shrui %42, %50 : vector<16x128xi32>
    %52 = arith.uitofp %51 : vector<16x128xi32> to vector<16x128xf32>
    %cst_8 = arith.constant 5.000000e-01 : f32
    %53 = vector.broadcast %cst_8 : f32 to vector<16x128xf32>
    %54 = arith.addf %52, %53 : vector<16x128xf32>
    %cst_9 = arith.constant 5.96046448E-8 : f32
    %55 = vector.broadcast %cst_9 : f32 to vector<16x128xf32>
    %56 = arith.mulf %54, %55 : vector<16x128xf32>
    %57 = math.log %49 : vector<16x128xf32>
    %cst_10 = arith.constant -2.000000e+00 : f32
    %58 = vector.broadcast %cst_10 : f32 to vector<16x128xf32>
    %59 = arith.mulf %58, %57 : vector<16x128xf32>
    %60 = math.sqrt %59 : vector<16x128xf32>
    %cst_11 = arith.constant 6.28318548 : f32
    %61 = vector.broadcast %cst_11 : f32 to vector<16x128xf32>
    %62 = arith.mulf %61, %56 : vector<16x128xf32>
    %63 = math.cos %62 : vector<16x128xf32>
    %64 = arith.mulf %60, %63 : vector<16x128xf32>
    %cst_12 = arith.constant 1.000000e+00 : f32
    %65 = vector.broadcast %cst_12 : f32 to vector<16x128xf32>
    %66 = arith.mulf %64, %65 : vector<16x128xf32>
    %cst_13 = arith.constant 1.000000e+00 : f32
    %67 = vector.broadcast %cst_13 : f32 to vector<16x128xf32>
    %68 = arith.addf %66, %67 : vector<16x128xf32>
    %c0_14 = arith.constant 0 : index
    %c0_15 = arith.constant 0 : index
    %69 = vector.load %arg2[%c0_14, %c0_15] : memref<16x128xf32, #tpu.memory_space<vmem>>, vector<16x128xf32>
    %70 = arith.mulf %69, %68 : vector<16x128xf32>
    %c0_16 = arith.constant 0 : index
    %c0_17 = arith.constant 0 : index
    %71 = vector.load %arg3[%c0_16, %c0_17] : memref<16x128xf32, #tpu.memory_space<vmem>>, vector<16x128xf32>
    tpu.vector_store %arg3[%c0_16, %c0_17], %70 {strides = array<i32>} : memref<16x128xf32, #tpu.memory_space<vmem>>, vector<16x128xf32>,
    return
  }
  func.func @transform_0(%arg0: i32, %arg1: memref<1xi32, #tpu.memory_space<smem>>) -> (i32, i32) {
    %c0_i32 = arith.constant 0 : i32
    %c0_i32_0 = arith.constant 0 : i32
    return %arg0, %c0_i32 : i32, i32
  }
  func.func @transform_1(%arg0: i32, %arg1: memref<1xi32, #tpu.memory_space<smem>>) -> (i32, i32) {
    %c0_i32 = arith.constant 0 : i32
    %c0_i32_0 = arith.constant 0 : i32
    return %arg0, %c0_i32 : i32, i32
  }
}

</mosaic_0001>

<llo_original>
// kernel: tpu_custom_call.1
$region0: #{tpu_custom_call.1}
  #allocation0 [shape = 'u32[]', space=smem, size = 0x4, offset = 0x4, fixed_abs, tag = 'smem constant byte address 0x4 - core index']
  #allocation1 [shape = 'u32[144,128]{1,0:T(1,128)}', space=vmem, size = 0x12000, scoped, tag = 'internal scratch']
  #allocation2 [shape = 's32[1]{0}', space=sflag, size = 0x4, scoped, tag = 'scoped memory for tpu_custom_call.1']
  #allocation3 [shape = 's32[1]{0:T(128)S(6)}', space=smem, size = 0x200, scoped, tag = 'prefetched SMEM operand 0']
  %s0 = inlined_call_operand.<no memory space> [shape: s32[1], index: 0, kind: input, shape index: {}]
  %s1 = inlined_call_operand.hbm [shape: f32[16,128], index: 1, kind: input, shape index: {}]
  %s2 = inlined_call_operand.hbm [shape: f32[16,128], index: 2, kind: output, shape index: {}]
  %s3 = sld [smem:[#allocation0]]
  $region18: #{tpu_custom_call.1} parent=0
    _
  %s5 = ssub.s32 1, %s3
  %s6 = scalar_select 0, %s5, %s3
  %7 = sst [smem:[#allocation3]] %s0
  $region1: #{tpu_custom_call.1} parent=0
    #allocation4 [shape = 'u8[8192]{0}', space=vmem, size = 0x2000, scoped, tag = 'input window, operand 1, single buffered']
    #allocation5 [shape = 's32[1]{0}', space=sflag, size = 0x4, scoped, tag = 'scoped memory for tpu_custom_call.1']
    #allocation6 [shape = 's32[1]{0}', space=sflag, size = 0x4, scoped, tag = 'scoped memory for tpu_custom_call.1']
    #allocation7 [shape = 'u8[8192]{0}', space=vmem, size = 0x2000, scoped, tag = 'output window, operand 0, single buffered']
    %8 = vsyncpa [#allocation5], 0
    %9 = vsyncpa [#allocation6], 0
    // Predicated region
    $region2: #{tpu_custom_call.1} parent=1 // pred_check
      _
    $region3: #{tpu_custom_call.1} parent=1 // pred_check_branch
      %11 = sbr.rel (0) target = $region5
    $region4: #{tpu_custom_call.1} parent=1 // pred_region
      %s13 = ssub.s32 256, 256
      %14 = vsyncadd [#allocation5], %s13
      %s15 = sshll.u32 [#allocation4], 4
      %s16 = int_to_ptr.vmem [resolvable:$true] %s15
      %21 = dma.hbm_to_vmem [thread:$0]  %s1, 256, %s16, [#allocation5], 128, 128, 8
    $region5: #{tpu_custom_call.1} parent=1 // pred_fallthru
      _
    // Predicated region
    $region6: #{tpu_custom_call.1} parent=1 // pred_check
      _
    $region7: #{tpu_custom_call.1} parent=1 // pred_check_branch
      %23 = sbr.rel (0) target = $region9
    $region8: #{tpu_custom_call.1} parent=1 // pred_region
      %24 = dma.done [#allocation5], 256
    $region9: #{tpu_custom_call.1} parent=1 // pred_fallthru
      _
    %s25 = sld [smem:[#allocation3]]
    %s26 = smul.u32 0, 2048
    %v27 = vlaneseq
    %v28 = vshrl.u32 %v27, 7
    %v29 = vadd.s32 %v28, 8
    %v30 = vlaneseq
    %v31 = vand.u32 %v30, 127
    %v32 = vmul.u32 %v28, 128
    %v33 = vmul.u32 %v29, 128
    %v34 = vstv %s26
    %v35 = vadd.s32 %v34, %v32
    %v36 = vadd.s32 %v34, %v33
    %v37 = vadd.s32 %v35, %v31
    %v38 = vadd.s32 %v36, %v31
    %s39 = smul.u32 %s25, 2654435769
    %s40 = sadd.s32 %s39, 2246822507
    %v41 = vstv %s40
    %v42 = vxor.u32 %v37, %v41
    %v43 = vxor.u32 %v38, %v41
    %v44 = vshrl.u32 %v42, 16
    %v45 = vshrl.u32 %v43, 16
    %v46 = vxor.u32 %v42, %v44
    %v47 = vxor.u32 %v43, %v45
    %v48 = vmul.u32 %v46, 2146121005
    %v49 = vmul.u32 %v47, 2146121005
    %v50 = vshrl.u32 %v48, 15
    %v51 = vshrl.u32 %v49, 15
    %v52 = vxor.u32 %v48, %v50
    %v53 = vxor.u32 %v49, %v51
    %v54 = vmul.u32 %v52, 2221713035
    %v55 = vmul.u32 %v53, 2221713035
    %v56 = vshrl.u32 %v54, 16
    %v57 = vshrl.u32 %v55, 16
    %v58 = vxor.u32 %v54, %v56
    %v59 = vxor.u32 %v55, %v57
    %s60 = smul.u32 %s25, 3266489909
    %s61 = sadd.s32 %s60, 668265263
    %v62 = vstv %s61
    %v63 = vxor.u32 %v37, %v62
    %v64 = vxor.u32 %v38, %v62
    %v65 = vshrl.u32 %v63, 16
    %v66 = vshrl.u32 %v64, 16
    %v67 = vxor.u32 %v63, %v65
    %v68 = vxor.u32 %v64, %v66
    %v69 = vmul.u32 %v67, 2146121005
    %v70 = vmul.u32 %v68, 2146121005
    %v71 = vshrl.u32 %v69, 15
    %v72 = vshrl.u32 %v70, 15
    %v73 = vxor.u32 %v69, %v71
    %v74 = vxor.u32 %v70, %v72
    %v75 = vmul.u32 %v73, 2221713035
    %v76 = vmul.u32 %v74, 2221713035
    %v77 = vshrl.u32 %v75, 16
    %v78 = vshrl.u32 %v76, 16
    %v79 = vxor.u32 %v75, %v77
    %v80 = vxor.u32 %v76, %v78
    %v81 = vshrl.u32 %v58, 8
    %v82 = vshrl.u32 %v59, 8
    %v83 = vshrl.u32 %v81, 16
    %v84 = vand.u32 %v81, 65535
    %v85 = vcvt.s32.f32 %v83
    %v86 = vmul.f32 %v85, 65536.0
    %v87 = vcvt.s32.f32 %v84
    %v88 = vadd.f32 %v86, %v87
    %v89 = vshrl.u32 %v82, 16
    %v90 = vand.u32 %v82, 65535
    %v91 = vcvt.s32.f32 %v89
    %v92 = vmul.f32 %v91, 65536.0
    %v93 = vcvt.s32.f32 %v90
    %v94 = vadd.f32 %v92, %v93
    %v95 = vadd.f32 %v88, 0.5
    %v96 = vadd.f32 %v94, 0.5
    %v97 = vmul.f32 %v95, 5.9604645e-08
    %v98 = vmul.f32 %v96, 5.9604645e-08
    %v99 = vshrl.u32 %v79, 8
    %v100 = vshrl.u32 %v80, 8
    %v101 = vshrl.u32 %v99, 16
    %v102 = vand.u32 %v99, 65535
    %v103 = vcvt.s32.f32 %v101
    %v104 = vmul.f32 %v103, 65536.0
    %v105 = vcvt.s32.f32 %v102
    %v106 = vadd.f32 %v104, %v105
    %v107 = vshrl.u32 %v100, 16
    %v108 = vand.u32 %v100, 65535
    %v109 = vcvt.s32.f32 %v107
    %v110 = vmul.f32 %v109, 65536.0
    %v111 = vcvt.s32.f32 %v108
    %v112 = vadd.f32 %v110, %v111
    %v113 = vadd.f32 %v106, 0.5
    %v114 = vadd.f32 %v112, 0.5
    %v115 = vmul.f32 %v113, 5.9604645e-08
    %v116 = vmul.f32 %v114, 5.9604645e-08
    %v117 = vlog2.pop %v97
    %v118 = vmul.f32 %v117, 0.6931472
    %v119 = vlog2.pop %v98
    %v120 = vmul.f32 %v119, 0.6931472
    %v121 = vmul.f32 %v118, -2.0
    %v122 = vmul.f32 %v120, -2.0
    %v123 = vrsqrt.pop %v121
    %v124 = vmul.f32 %v121, %v123
    %vm125 = vcmp.eq.f32.partialorder %v121, inf
    %v126 = vsel %vm125, %v121, %v124
    %vm127 = vcmp.eq.f32.partialorder %v121, 0.0
    %v128 = vand.u32 %v121, 2147483648
    %v129 = vsel %vm127, %v128, %v126
    %v130 = vrsqrt.pop %v122
    %v131 = vmul.f32 %v122, %v130
    %vm132 = vcmp.eq.f32.partialorder %v122, inf
    %v133 = vsel %vm132, %v122, %v131
    %vm134 = vcmp.eq.f32.partialorder %v122, 0.0
    %v135 = vand.u32 %v122, 2147483648
    %v136 = vsel %vm134, %v135, %v133
    %v137 = vmul.f32 %v115, 6.2831855
    %v138 = vmul.f32 %v116, 6.2831855
    %v139 = vand.u32 2147483647, %v137
    %vm140 = vcmp.le.f32.partialorder %v139, 0.7853982
    %vm141 = vcmp.lt.s32.totalorder %v137, 0
    %v142 = vand.u32 %v137, 2139095040
    %v143 = vshrl.u32 %v142, 23
    %v144 = vsub.s32 %v143, 127
    %v145 = vand.u32 2147483647, %v137
    %v146 = vand.u32 %v145, 8388607
    %v147 = vor.u32 %v146, 8388608
    %v148 = vsub.s32 0, %v147
    %v149 = vadd.s32 %v144, 1
    %vm150 = vcmp.gt.s32.totalorder %v149, 0
    %v151 = vsel %vm150, %v149, 0
    %v152 = vshrl.u32 %v151, 5
    %v153 = vand.u32 %v151, 31
    %v154 = vsub.s32 32, %v153
    %v155 = vshrl.u32 683565275, %v154
    %v156 = vshll.u32 683565275, %v153
    %v157 = vshrl.u32 2475754826, %v154
    %v158 = vor.u32 %v156, %v157
    %v159 = vshll.u32 2475754826, %v153
    %v160 = vshrl.u32 2131351028, %v154
    %v161 = vor.u32 %v159, %v160
    %v162 = vshll.u32 2131351028, %v153
    %v163 = vshrl.u32 2102212464, %v154
    %v164 = vor.u32 %v162, %v163
    %v165 = vshll.u32 2102212464, %v153
    %v166 = vshrl.u32 920167782, %v154
    %v167 = vor.u32 %v165, %v166
    %v168 = vshll.u32 920167782, %v153
    %v169 = vshrl.u32 1326507024, %v154
    %v170 = vor.u32 %v168, %v169
    %vm171 = vcmp.lt.s32.totalorder %v152, 1
    %vm172 = vcmp.lt.s32.totalorder %v152, 2
    %vm173 = vcmp.lt.s32.totalorder %v152, 3
    %vm174 = vcmp.lt.s32.totalorder %v152, 4
    %v175 = vsel %vm171, %v155, %v158
    %v176 = vsel %vm174, %v164, 2102212464
    %v177 = vsel %vm173, %v161, %v176
    %v178 = vsel %vm172, %v175, %v177
    %v179 = vsel %vm171, %v158, %v161
    %v180 = vsel %vm174, %v167, 920167782
    %v181 = vsel %vm173, %v164, %v180
    %v182 = vsel %vm172, %v179, %v181
    %v183 = vsel %vm171, %v161, %v164
    %v184 = vsel %vm174, %v170, 1326507024
    %v185 = vsel %vm173, %v167, %v184
    %v186 = vsel %vm172, %v183, %v185
    %v187 = vshll.u32 %v147, 8
    %v188 = vmul.u32.u64.compose %v187, %v186
    %v189 = vextract.low.u32 %v188
    %v190 = vextract.high.u32 %v188
    %v191 = vmul.u32.u64.compose %v187, %v182
    %v192 = vextract.low.u32 %v191
    %v193 = vextract.high.u32 %v191
    %v194 = vmul.u32 %v187, %v178
    %v195 = vadd.s32 %v190, %v192
    %vm196 = vc.u32 %v190, %v192
    %v197 = vadd.s32 %v193, 1
    %v198 = vsel %vm196, %v197, %v193
    %v199 = vadd.s32 %v194, %v198
    %v200 = vadd.s32 %v199, 536870912
    %v201 = vshrl.u32 %v200, 30
    %v202 = vshll.u32 %v201, 30
    %v203 = vsub.s32 %v199, %v202
    %vm204 = vcmp.lt.s32.totalorder %v203, 0
    %v205 = vsub.s32 0, %v203
    %v206 = vsel %vm204, %v205, %v203
    %v207 = vclz %v206
    %v208 = vsub.s32 %v207, 2
    %vm209 = vcmp.gt.s32.totalorder 0, %v208
    %v210 = vsel %vm209, 0, %v208
    %v211 = vsub.s32 32, %v210
    %v212 = vshll.u32 %v203, %v210
    %v213 = vshrl.u32 %v195, %v211
    %v214 = vor.u32 %v212, %v213
    %v215 = vsub.s32 4294967266, %v210
    %v216 = vadd.s32 %v215, 127
    %v217 = vshll.u32 %v216, 23
    %v218 = vor.u32 4788187, %v217
    %v219 = vand.u32 2147483647, %v218
    %v221 = vcvt.s32.f32 %v214
    %v222 = vmul.f32 %v221, %v219
    %v223 = vxor.u32 %v222, 2147483648
    %v224 = vsel %vm141, %v223, %v222
    %v225 = vsub.s32 4, %v201
    %v226 = vsel %vm141, %v225, %v201
    %v227 = vsel %vm140, %v137, %v224
    %v228 = vsel %vm140, 0, %v226
    %v229 = vcosq.f32.pop %v227
    %v230 = vsinq.f32.pop %v227
    %vm231 = vweird.f32 %v137
    %v232 = vand.u32 %v228, 3
    %vm233 = vcmp.lt.s32.totalorder %v232, 2
    %vm234 = vcmp.eq.s32.totalorder %v232, 0
    %v235 = vxor.u32 %v230, 2147483648
    %v236 = vsel %vm234, %v229, %v235
    %vm237 = vcmp.eq.s32.totalorder %v232, 2
    %v238 = vxor.u32 %v229, 2147483648
    %v239 = vsel %vm237, %v238, %v230
    %v240 = vsel %vm233, %v236, %v239
    %v241 = vsel %vm231, nan, %v240
    %v242 = vand.u32 2147483647, %v138
    %vm243 = vcmp.le.f32.partialorder %v242, 0.7853982
    %vm244 = vcmp.lt.s32.totalorder %v138, 0
    %v245 = vand.u32 %v138, 2139095040
    %v246 = vshrl.u32 %v245, 23
    %v247 = vsub.s32 %v246, 127
    %v248 = vand.u32 2147483647, %v138
    %v249 = vand.u32 %v248, 8388607
    %v250 = vor.u32 %v249, 8388608
    %v251 = vsub.s32 0, %v250
    %v252 = vadd.s32 %v247, 1
    %vm253 = vcmp.gt.s32.totalorder %v252, 0
    %v254 = vsel %vm253, %v252, 0
    %v255 = vshrl.u32 %v254, 5
    %v256 = vand.u32 %v254, 31
    %v257 = vsub.s32 32, %v256
    %v258 = vshrl.u32 683565275, %v257
    %v259 = vshll.u32 683565275, %v256
    %v260 = vshrl.u32 2475754826, %v257
    %v261 = vor.u32 %v259, %v260
    %v262 = vshll.u32 2475754826, %v256
    %v263 = vshrl.u32 2131351028, %v257
    %v264 = vor.u32 %v262, %v263
    %v265 = vshll.u32 2131351028, %v256
    %v266 = vshrl.u32 2102212464, %v257
    %v267 = vor.u32 %v265, %v266
    %v268 = vshll.u32 2102212464, %v256
    %v269 = vshrl.u32 920167782, %v257
    %v270 = vor.u32 %v268, %v269
    %v271 = vshll.u32 920167782, %v256
    %v272 = vshrl.u32 1326507024, %v257
    %v273 = vor.u32 %v271, %v272
    %vm274 = vcmp.lt.s32.totalorder %v255, 1
    %vm275 = vcmp.lt.s32.totalorder %v255, 2
    %vm276 = vcmp.lt.s32.totalorder %v255, 3
    %vm277 = vcmp.lt.s32.totalorder %v255, 4
    %v278 = vsel %vm274, %v258, %v261
    %v279 = vsel %vm277, %v267, 2102212464
    %v280 = vsel %vm276, %v264, %v279
    %v281 = vsel %vm275, %v278, %v280
    %v282 = vsel %vm274, %v261, %v264
    %v283 = vsel %vm277, %v270, 920167782
    %v284 = vsel %vm276, %v267, %v283
    %v285 = vsel %vm275, %v282, %v284
    %v286 = vsel %vm274, %v264, %v267
    %v287 = vsel %vm277, %v273, 1326507024
    %v288 = vsel %vm276, %v270, %v287
    %v289 = vsel %vm275, %v286, %v288
    %v290 = vshll.u32 %v250, 8
    %v291 = vmul.u32.u64.compose %v290, %v289
    %v292 = vextract.low.u32 %v291
    %v293 = vextract.high.u32 %v291
    %v294 = vmul.u32.u64.compose %v290, %v285
    %v295 = vextract.low.u32 %v294
    %v296 = vextract.high.u32 %v294
    %v297 = vmul.u32 %v290, %v281
    %v298 = vadd.s32 %v293, %v295
    %vm299 = vc.u32 %v293, %v295
    %v300 = vadd.s32 %v296, 1
    %v301 = vsel %vm299, %v300, %v296
    %v302 = vadd.s32 %v297, %v301
    %v303 = vadd.s32 %v302, 536870912
    %v304 = vshrl.u32 %v303, 30
    %v305 = vshll.u32 %v304, 30
    %v306 = vsub.s32 %v302, %v305
    %vm307 = vcmp.lt.s32.totalorder %v306, 0
    %v308 = vsub.s32 0, %v306
    %v309 = vsel %vm307, %v308, %v306
    %v310 = vclz %v309
    %v311 = vsub.s32 %v310, 2
    %vm312 = vcmp.gt.s32.totalorder 0, %v311
    %v313 = vsel %vm312, 0, %v311
    %v314 = vsub.s32 32, %v313
    %v315 = vshll.u32 %v306, %v313
    %v316 = vshrl.u32 %v298, %v314
    %v317 = vor.u32 %v315, %v316
    %v318 = vsub.s32 4294967266, %v313
    %v319 = vadd.s32 %v318, 127
    %v320 = vshll.u32 %v319, 23
    %v321 = vor.u32 4788187, %v320
    %v322 = vand.u32 2147483647, %v321
    %v324 = vcvt.s32.f32 %v317
    %v325 = vmul.f32 %v324, %v322
    %v326 = vxor.u32 %v325, 2147483648
    %v327 = vsel %vm244, %v326, %v325
    %v328 = vsub.s32 4, %v304
    %v329 = vsel %vm244, %v328, %v304
    %v330 = vsel %vm243, %v138, %v327
    %v331 = vsel %vm243, 0, %v329
    %v332 = vcosq.f32.pop %v330
    %v333 = vsinq.f32.pop %v330
    %vm334 = vweird.f32 %v138
    %v335 = vand.u32 %v331, 3
    %vm336 = vcmp.lt.s32.totalorder %v335, 2
    %vm337 = vcmp.eq.s32.totalorder %v335, 0
    %v338 = vxor.u32 %v333, 2147483648
    %v339 = vsel %vm337, %v332, %v338
    %vm340 = vcmp.eq.s32.totalorder %v335, 2
    %v341 = vxor.u32 %v332, 2147483648
    %v342 = vsel %vm340, %v341, %v333
    %v343 = vsel %vm336, %v339, %v342
    %v344 = vsel %vm334, nan, %v343
    %v345 = vmul.f32 %v129, %v241
    %v346 = vmul.f32 %v136, %v344
    %v347 = vadd.f32 %v345, 1.0
    %v348 = vadd.f32 %v346, 1.0
    %v349 = vld [vmem:[#allocation4] sm:$0xff]
    %v350 = vld [vmem:[#allocation4 + $0x8] sm:$0xff]
    %v351 = vmul.f32 %v349, %v347
    %v352 = vmul.f32 %v350, %v348
    %353 = vst [vmem:[#allocation7] sm:$0xff] %v351
    %354 = vst [vmem:[#allocation7 + $0x8] sm:$0xff] %v352
    // Predicated region
    $region10: #{tpu_custom_call.1} parent=1 // pred_check
      _
    $region11: #{tpu_custom_call.1} parent=1 // pred_check_branch
      %356 = sbr.rel (0) target = $region13
    $region12: #{tpu_custom_call.1} parent=1 // pred_region
      %s358 = ssub.s32 256, 256
      %359 = vsyncadd [#allocation6], %s358
      %s360 = sshll.u32 [#allocation7], 4
      %s361 = int_to_ptr.vmem [resolvable:$true] %s360
      %366 = dma.vmem_to_hbm [thread:$0]  %s361, 256, %s2, [#allocation6], 128, 128, 8
    $region13: #{tpu_custom_call.1} parent=1 // pred_fallthru
      _
    // Predicated region
    $region14: #{tpu_custom_call.1} parent=1 // pred_check
      _
    $region15: #{tpu_custom_call.1} parent=1 // pred_check_branch
      %368 = sbr.rel (0) target = $region17
    $region16: #{tpu_custom_call.1} parent=1 // pred_region
      %369 = dma.done [#allocation6], 256
    $region17: #{tpu_custom_call.1} parent=1 // pred_fallthru
      _
    %370 = vsyncpa [#allocation5], 1
    %371 = vsyncpa [#allocation6], 1

</llo_original>
